<compile_context>
chip_gen: v5e
topology: v5e:2x2
jax: 0.10.0
libtpu: 0.0.40
codegen_flags: <defaults>
</compile_context>

<pallas_src>
import functools

import jax
import jax.numpy as jnp
from jax.experimental import pallas as pl
from jax.experimental.pallas import tpu as pltpu


def _cdiv(a, b):
    return -(-a // b)


def _pick_tile_rows(rows, c, n, pred_itemsize, tgt_itemsize):
    """Rows-of-128-pixels per tile: large enough to amortize per-step overhead and saturate HBM,
    small enough that double-buffered inputs + f32 intermediates fit the per-generation VMEM."""
    try:
        vmem_cap = pltpu.get_tpu_info().vmem_capacity_bytes
    except Exception:            # conservative fallback = v7x per-TC capacity, safe everywhere
        vmem_cap = 64 << 20
    # Scoped-VMEM ceiling: <= 48 MiB on 128-MiB parts (v5e/v6e), ~55% of capacity on v7x (64 MiB).
    vmem_ceiling = min(48 << 20, int(vmem_cap * 0.55))
    budget = vmem_ceiling - (2 << 20)        # headroom for outputs / compiler internals

    per_pixel = (2 * 2 * c * pred_itemsize   # two pred inputs, double-buffered
                 + 2 * tgt_itemsize          # target block, double-buffered
                 + 8 * c * 4                 # conservative f32 (C, TR, 128) intermediates
                 + 16 * 4)                   # f32 per-pixel temporaries
    vmem_pixels = budget // per_pixel
    # DMA-amortization target: ~8 MiB of logit bytes per grid step (>> ~0.35 us step overhead,
    # ~2.5 us of transfer even at v7x's 3.2 TB/s).
    dma_pixels = (8 << 20) // (2 * c * pred_itemsize)

    pixels = max(1024, min(vmem_pixels, dma_pixels))
    tile_rows = max(8, (pixels // 128) // 8 * 8)
    if tile_rows >= rows:
        tile_rows = rows                      # full extent satisfies the (8,128) block rule
    # Keep >= 2 total grid steps when possible so both v7x TensorCores get work.
    if n * _cdiv(rows, tile_rows) < 2 and rows >= 16:
        tile_rows = min(rows, _cdiv(_cdiv(rows, 2), 8) * 8)
    return tile_rows, vmem_ceiling


def _ce_pseudo_kernel(p1_ref, p2_ref, t_ref, wce_ref, var_ref, *,
                      ignore_index, hw, tile_rows, need_mask):
    """One tile: (C, TILE_R, 128) logits, (TILE_R, 128) targets -> (1, 128) partial sums."""
    p1 = p1_ref[0].astype(jnp.float32)           # (C, TR, 128)
    p2 = p2_ref[0].astype(jnp.float32)           # (C, TR, 128)
    t = t_ref[0].astype(jnp.int32)               # (TR, 128)

    c, tr, _ = p1.shape

    # Class-axis statistics. Axis 0 is the non-layout axis -> plain vreg max/add loops, no XLU.
    m1 = jnp.max(p1, axis=0)                     # (TR, 128)
    m2 = jnp.max(p2, axis=0)
    s1 = jnp.sum(jnp.exp(p1 - m1[None]), axis=0)
    e2 = jnp.exp(p2 - m2[None])
    s2 = jnp.sum(e2, axis=0)
    num = jnp.sum(e2 * (p2 - p1), axis=0)
    ls1 = jnp.log(s1)
    ls2 = jnp.log(s2)

    # KL(softmax(p2) || softmax(p1)) per pixel, without materializing logp1/logp2/softmax(p2).
    inv_s2 = pl.reciprocal(s2, approx=True)      # EUP vrcp: frees VALU cycles
    variance = num * inv_s2 + (m1 - m2) + (ls1 - ls2)            # (TR, 128)

    # Cross-entropy: CE = m1 + log s1 - p1[target] (gather via compare-select over classes).
    cls = jax.lax.broadcasted_iota(jnp.int32, (c, tr, 128), 0)
    p1_t = jnp.sum(jnp.where(cls == t[None], p1, 0.0), axis=0)   # (TR, 128)
    ce = m1 + ls1 - p1_t
    # With the algebraic form an out-of-range ignore_index no longer self-zeros via the one-hot,
    # so mask every ignored pixel explicitly (CE contributes 0 but still counts in the mean).
    ce = jnp.where(t == ignore_index, 0.0, ce)

    wce = ce * jnp.exp(-variance)

    if need_mask:
        # Tail tile / 128-padding: zero lanes whose global pixel index falls past H*W.
        row0 = pl.program_id(1) * tile_rows
        pix = ((row0 + jax.lax.broadcasted_iota(jnp.int32, (tr, 128), 0)) * 128
               + jax.lax.broadcasted_iota(jnp.int32, (tr, 128), 1))
        valid = pix < hw
        wce = jnp.where(valid, wce, 0.0)
        variance = jnp.where(valid, variance, 0.0)

    # In-kernel partial reduction: one lane-dense (1, 128) row per output per grid step.
    wce_ref[...] = jnp.sum(wce, axis=0, keepdims=True)[None]     # (1, 1, 128)
    var_ref[...] = jnp.sum(variance, axis=0, keepdims=True)[None]


@functools.partial(jax.jit, static_argnames=("ignore_index",))
def ce_with_pseudo(pred1, pred2, target, ignore_index=-1):
    """Pallas implementation of CEWithPseudo.forward.

    pred1, pred2: (N, C, H, W) float logits (f32 or bf16; NCHW like PyTorch).
    target:       (N, H, W) integer class indices (ignore_index allowed).
    Returns a scalar float32 loss.
    """
    n, c, h, w = pred1.shape
    hw = h * w
    rows = _cdiv(hw, 128)
    hw_pad = rows * 128

    # Free reshapes: NCHW is already contiguous as (N, C, H*W).
    p1 = pred1.reshape(n, c, hw)
    p2 = pred2.reshape(n, c, hw)
    tgt = target.reshape(n, hw)
    if not (jnp.issubdtype(tgt.dtype, jnp.integer) and tgt.dtype.itemsize <= 4):
        tgt = tgt.astype(jnp.int32)          # narrow int targets are fed through as-is

    if hw_pad != hw:
        # TODO(synk): the pad is one extra HBM pass over the logits; rare for dense-prediction
        # shapes (H*W is usually already a multiple of 128).
        pad = hw_pad - hw
        p1 = jnp.pad(p1, ((0, 0), (0, 0), (0, pad)))
        p2 = jnp.pad(p2, ((0, 0), (0, 0), (0, pad)))
        tgt = jnp.pad(tgt, ((0, 0), (0, pad)))

    # Pixels -> (rows, 128): each tile is a stack of full (8, 128) vregs regardless of C.
    p1 = p1.reshape(n, c, rows, 128)
    p2 = p2.reshape(n, c, rows, 128)
    tgt = tgt.reshape(n, rows, 128)

    tile_rows, vmem_limit = _pick_tile_rows(rows, c, n, pred1.dtype.itemsize, tgt.dtype.itemsize)
    n_tiles = _cdiv(rows, tile_rows)
    need_mask = (hw_pad != hw) or (rows % tile_rows != 0)

    kernel = functools.partial(_ce_pseudo_kernel, ignore_index=int(ignore_index),
                               hw=hw, tile_rows=tile_rows, need_mask=need_mask)

    cost = pl.CostEstimate(
        flops=int(n * hw_pad * (12 * c + 30)),
        transcendentals=int(n * hw_pad * (2 * c + 4)),
        bytes_accessed=int(n * hw_pad * (2 * c * pred1.dtype.itemsize + tgt.dtype.itemsize)
                           + 2 * n * n_tiles * 128 * 4),
    )

    wce_part, var_part = pl.pallas_call(
        kernel,
        out_shape=(
            jax.ShapeDtypeStruct((n, 1, n_tiles * 128), jnp.float32),
            jax.ShapeDtypeStruct((n, 1, n_tiles * 128), jnp.float32),
        ),
        grid_spec=pltpu.PrefetchScalarGridSpec(
            num_scalar_prefetch=0,
            grid=(n, n_tiles),
            in_specs=[
                pl.BlockSpec((1, c, tile_rows, 128), lambda b, t: (b, 0, t, 0)),
                pl.BlockSpec((1, c, tile_rows, 128), lambda b, t: (b, 0, t, 0)),
                pl.BlockSpec((1, tile_rows, 128), lambda b, t: (b, t, 0)),
            ],
            out_specs=[
                pl.BlockSpec((1, 1, 128), lambda b, t: (b, 0, t)),
                pl.BlockSpec((1, 1, 128), lambda b, t: (b, 0, t)),
            ],
        ),
        compiler_params=pltpu.CompilerParams(
            dimension_semantics=("parallel", "parallel"),
            vmem_limit_bytes=int(vmem_limit),
        ),
        cost_estimate=cost,
    )(p1, p2, tgt)

    # TODO(synk): for C >= 128 the class-axis sums could run as ones(1,C)@(C,P) MXU matmuls to
    # offload the reduce-adds from the VPU; not worth it for typical segmentation class counts.
    # TODO(synk): if small tiles are forced by very large C on v5e, pipeline_mode=pl.Buffered(3)
    # on the two pred BlockSpecs would hide the exposed DMA; the large default tiles cover it.
    return (jnp.sum(wce_part) + jnp.sum(var_part)) / jnp.float32(n * hw)


def ce_with_pseudo_ref(pred1, pred2, target, ignore_index=-1):
    """Pure-JAX reference mirroring the PyTorch module."""
    logp1 = jax.nn.log_softmax(pred1, axis=1)
    logp2 = jax.nn.log_softmax(pred2, axis=1)
    sm2 = jnp.exp(logp2)
    variance = jnp.sum(sm2 * (logp2 - logp1), axis=1)          # (N, H, W)
    tgt = target
    safe_tgt = jnp.where(tgt == ignore_index, 0, tgt)
    ce = -jnp.take_along_axis(logp1, safe_tgt[:, None, :, :], axis=1)[:, 0]
    ce = jnp.where(tgt == ignore_index, 0.0, ce)
    return jnp.mean(ce * jnp.exp(-variance)) + jnp.mean(variance)


if __name__ == "__main__":
    key = jax.random.PRNGKey(0)

    def run_case(n, c, h, w, dtype, ignore_index, k):
        k1, k2, k3 = jax.random.split(k, 3)
        pred1 = jax.random.normal(k1, (n, c, h, w), dtype=jnp.float32).astype(dtype)
        pred2 = jax.random.normal(k2, (n, c, h, w), dtype=jnp.float32).astype(dtype)
        target = jax.random.randint(k3, (n, h, w), 0, c, dtype=jnp.int32)
        target = target.at[0, 0, : max(1, w // 4)].set(ignore_index)
        loss = jax.block_until_ready(
            ce_with_pseudo(pred1, pred2, target, ignore_index=ignore_index))
        loss_ref = jax.block_until_ready(
            ce_with_pseudo_ref(pred1.astype(jnp.float32), pred2.astype(jnp.float32),
                               target, ignore_index=ignore_index))
        # Tolerance covers the approx (EUP) reciprocal used for 1/sum(exp(pred2)).
        assert jnp.allclose(loss, loss_ref, rtol=5e-3, atol=5e-3), (loss, loss_ref)

    k1, k2, k3 = jax.random.split(key, 3)
    run_case(2, 4, 16, 16, jnp.float32, -1, k1)    # baseline: small C, H*W % 128 == 0
    run_case(1, 5, 15, 15, jnp.float32, -1, k2)    # padded + masked tail: H*W = 225
    run_case(2, 8, 16, 16, jnp.bfloat16, -1, k3)   # bf16 logits fed straight into the kernel
    print("KERNEL_OK")
</pallas_src>

<mosaic_0001>
module attributes {stable_mosaic.version = 11 : i64} {
  func.func @_ce_pseudo_kernel(%arg0: i32, %arg1: i32, %arg2: memref<1x4x2x128xf32, #tpu.memory_space<vmem>>, %arg3: memref<1x4x2x128xf32, #tpu.memory_space<vmem>>, %arg4: memref<1x2x128xi32, #tpu.memory_space<vmem>>, %arg5: memref<1x1x128xf32, #tpu.memory_space<vmem>>, %arg6: memref<1x1x128xf32, #tpu.memory_space<vmem>>) attributes {dimension_semantics = [#tpu.dimension_semantics<parallel>, #tpu.dimension_semantics<parallel>], iteration_bounds = array<i64: 2, 1>, scalar_prefetch = 0 : i64, scratch_operands = 0 : i64, tpu.core_type = #tpu.core_type<tc>, window_params = [{transform_indices = @transform_0, window_bounds = array<i64: 1, 4, 2, 128>}, {transform_indices = @transform_1, window_bounds = array<i64: 1, 4, 2, 128>}, {transform_indices = @transform_2, window_bounds = array<i64: 1, 2, 128>}, {transform_indices = @transform_3, window_bounds = array<i64: 1, 1, 128>}, {transform_indices = @transform_4, window_bounds = array<i64: 1, 1, 128>}]} {
    %c0 = arith.constant 0 : index
    %c0_0 = arith.constant 0 : index
    %c0_1 = arith.constant 0 : index
    %c0_2 = arith.constant 0 : index
    %0 = vector.load %arg2[%c0, %c0_0, %c0_1, %c0_2] : memref<1x4x2x128xf32, #tpu.memory_space<vmem>>, vector<1x4x2x128xf32>
    %1 = vector.shape_cast %0 : vector<1x4x2x128xf32> to vector<4x2x128xf32>
    %c0_3 = arith.constant 0 : index
    %c0_4 = arith.constant 0 : index
    %c0_5 = arith.constant 0 : index
    %c0_6 = arith.constant 0 : index
    %2 = vector.load %arg3[%c0_3, %c0_4, %c0_5, %c0_6] : memref<1x4x2x128xf32, #tpu.memory_space<vmem>>, vector<1x4x2x128xf32>
    %3 = vector.shape_cast %2 : vector<1x4x2x128xf32> to vector<4x2x128xf32>
    %c0_7 = arith.constant 0 : index
    %c0_8 = arith.constant 0 : index
    %c0_9 = arith.constant 0 : index
    %4 = vector.load %arg4[%c0_7, %c0_8, %c0_9] : memref<1x2x128xi32, #tpu.memory_space<vmem>>, vector<1x2x128xi32>
    %5 = vector.shape_cast %4 : vector<1x2x128xi32> to vector<2x128xi32>
    %cst = arith.constant dense<0xFF800000> : vector<2x128xf32>
    %6 = vector.multi_reduction <maximumf>, %1, %cst [0] : vector<4x2x128xf32> to vector<2x128xf32>
    %cst_10 = arith.constant dense<0xFF800000> : vector<2x128xf32>
    %7 = vector.multi_reduction <maximumf>, %3, %cst_10 [0] : vector<4x2x128xf32> to vector<2x128xf32>
    %8 = vector.shape_cast %6 : vector<2x128xf32> to vector<1x2x128xf32>
    %9 = vector.broadcast %8 : vector<1x2x128xf32> to vector<4x2x128xf32>
    %10 = arith.subf %1, %9 : vector<4x2x128xf32>
    %11 = math.exp %10 : vector<4x2x128xf32>
    %cst_11 = arith.constant dense<0.000000e+00> : vector<2x128xf32>
    %12 = vector.multi_reduction <add>, %11, %cst_11 [0] : vector<4x2x128xf32> to vector<2x128xf32>
    %13 = vector.shape_cast %7 : vector<2x128xf32> to vector<1x2x128xf32>
    %14 = vector.broadcast %13 : vector<1x2x128xf32> to vector<4x2x128xf32>
    %15 = arith.subf %3, %14 : vector<4x2x128xf32>
    %16 = math.exp %15 : vector<4x2x128xf32>
    %cst_12 = arith.constant dense<0.000000e+00> : vector<2x128xf32>
    %17 = vector.multi_reduction <add>, %16, %cst_12 [0] : vector<4x2x128xf32> to vector<2x128xf32>
    %18 = arith.subf %3, %1 : vector<4x2x128xf32>
    %19 = arith.mulf %16, %18 : vector<4x2x128xf32>
    %cst_13 = arith.constant dense<0.000000e+00> : vector<2x128xf32>
    %20 = vector.multi_reduction <add>, %19, %cst_13 [0] : vector<4x2x128xf32> to vector<2x128xf32>
    %21 = math.log %12 : vector<2x128xf32>
    %22 = math.log %17 : vector<2x128xf32>
    %23 = tpu.reciprocal %17 {approx = true} : vector<2x128xf32> -> vector<2x128xf32>
    %24 = arith.mulf %20, %23 : vector<2x128xf32>
    %25 = arith.subf %6, %7 : vector<2x128xf32>
    %26 = arith.addf %24, %25 : vector<2x128xf32>
    %27 = arith.subf %21, %22 : vector<2x128xf32>
    %28 = arith.addf %26, %27 : vector<2x128xf32>
    %29 = tpu.iota {dimensions = array<i32: 0>} : vector<4x2x128xi32>
    %30 = vector.shape_cast %5 : vector<2x128xi32> to vector<1x2x128xi32>
    %31 = vector.broadcast %30 : vector<1x2x128xi32> to vector<4x2x128xi32>
    %32 = arith.cmpi eq, %29, %31 : vector<4x2x128xi32>
    %cst_14 = arith.constant 0.000000e+00 : f32
    %33 = vector.broadcast %cst_14 : f32 to vector<4x2x128xf32>
    %34 = arith.select %32, %1, %33 : vector<4x2x128xi1>, vector<4x2x128xf32>
    %cst_15 = arith.constant dense<0.000000e+00> : vector<2x128xf32>
    %35 = vector.multi_reduction <add>, %34, %cst_15 [0] : vector<4x2x128xf32> to vector<2x128xf32>
    %36 = arith.addf %6, %21 : vector<2x128xf32>
    %37 = arith.subf %36, %35 : vector<2x128xf32>
    %c-1_i32 = arith.constant -1 : i32
    %38 = vector.broadcast %c-1_i32 : i32 to vector<2x128xi32>
    %39 = arith.cmpi eq, %5, %38 : vector<2x128xi32>
    %cst_16 = arith.constant 0.000000e+00 : f32
    %40 = vector.broadcast %cst_16 : f32 to vector<2x128xf32>
    %41 = arith.select %39, %40, %37 : vector<2x128xi1>, vector<2x128xf32>
    %cst_17 = arith.constant 0.000000e+00 : f32
    %42 = vector.broadcast %cst_17 : f32 to vector<2x128xf32>
    %43 = arith.subf %42, %28 : vector<2x128xf32>
    %44 = math.exp %43 : vector<2x128xf32>
    %45 = arith.mulf %41, %44 : vector<2x128xf32>
    %cst_18 = arith.constant dense<0.000000e+00> : vector<128xf32>
    %46 = vector.multi_reduction <add>, %45, %cst_18 [0] : vector<2x128xf32> to vector<128xf32>
    %47 = vector.shape_cast %46 : vector<128xf32> to vector<1x128xf32>
    %48 = vector.shape_cast %47 : vector<1x128xf32> to vector<1x1x128xf32>
    %c0_19 = arith.constant 0 : index
    %c0_20 = arith.constant 0 : index
    %c0_21 = arith.constant 0 : index
    %49 = vector.load %arg5[%c0_19, %c0_20, %c0_21] : memref<1x1x128xf32, #tpu.memory_space<vmem>>, vector<1x1x128xf32>
    tpu.vector_store %arg5[%c0_19, %c0_20, %c0_21], %48 {strides = array<i32>} : memref<1x1x128xf32, #tpu.memory_space<vmem>>, vector<1x1x128xf32>,
    %cst_22 = arith.constant dense<0.000000e+00> : vector<128xf32>
    %50 = vector.multi_reduction <add>, %28, %cst_22 [0] : vector<2x128xf32> to vector<128xf32>
    %51 = vector.shape_cast %50 : vector<128xf32> to vector<1x128xf32>
    %52 = vector.shape_cast %51 : vector<1x128xf32> to vector<1x1x128xf32>
    %c0_23 = arith.constant 0 : index
    %c0_24 = arith.constant 0 : index
    %c0_25 = arith.constant 0 : index
    %53 = vector.load %arg6[%c0_23, %c0_24, %c0_25] : memref<1x1x128xf32, #tpu.memory_space<vmem>>, vector<1x1x128xf32>
    tpu.vector_store %arg6[%c0_23, %c0_24, %c0_25], %52 {strides = array<i32>} : memref<1x1x128xf32, #tpu.memory_space<vmem>>, vector<1x1x128xf32>,
    return
  }
  func.func @transform_0(%arg0: i32, %arg1: i32) -> (i32, i32, i32, i32) {
    %c0_i32 = arith.constant 0 : i32
    %c0_i32_0 = arith.constant 0 : i32
    %c0_i32_1 = arith.constant 0 : i32
    return %arg0, %c0_i32, %arg1, %c0_i32_0 : i32, i32, i32, i32
  }
  func.func @transform_1(%arg0: i32, %arg1: i32) -> (i32, i32, i32, i32) {
    %c0_i32 = arith.constant 0 : i32
    %c0_i32_0 = arith.constant 0 : i32
    %c0_i32_1 = arith.constant 0 : i32
    return %arg0, %c0_i32, %arg1, %c0_i32_0 : i32, i32, i32, i32
  }
  func.func @transform_2(%arg0: i32, %arg1: i32) -> (i32, i32, i32) {
    %c0_i32 = arith.constant 0 : i32
    %c0_i32_0 = arith.constant 0 : i32
    return %arg0, %arg1, %c0_i32 : i32, i32, i32
  }
  func.func @transform_3(%arg0: i32, %arg1: i32) -> (i32, i32, i32) {
    %c0_i32 = arith.constant 0 : i32
    %c0_i32_0 = arith.constant 0 : i32
    return %arg0, %c0_i32, %arg1 : i32, i32, i32
  }
  func.func @transform_4(%arg0: i32, %arg1: i32) -> (i32, i32, i32) {
    %c0_i32 = arith.constant 0 : i32
    %c0_i32_0 = arith.constant 0 : i32
    return %arg0, %c0_i32, %arg1 : i32, i32, i32
  }
}

</mosaic_0001>

<llo_original>
// kernel: ce_with_pseudo.1
$region0: #{ce_with_pseudo.1}
  #allocation0 [shape = 'u32[]', space=smem, size = 0x4, offset = 0x4, fixed_abs, tag = 'smem constant byte address 0x4 - core index']
  #allocation1 [shape = 'u32[72,128]{1,0:T(1,128)}', space=vmem, size = 0x9000, scoped, tag = 'internal scratch']
  %s0 = inlined_call_operand.vmem [shape: f32[2,4,2,128], index: 0, kind: input, shape index: {}]
  %s1 = inlined_call_operand.vmem [shape: f32[2,4,2,128], index: 1, kind: input, shape index: {}]
  %s2 = inlined_call_operand.vmem [shape: s32[2,2,128], index: 2, kind: input, shape index: {}]
  %s3 = inlined_call_operand.vmem [shape: f32[2,1,128], index: 3, kind: output, shape index: {0}]
  %s4 = inlined_call_operand.vmem [shape: f32[2,1,128], index: 4, kind: output, shape index: {1}]
  %5 = xla_tuple %s3, %s4
  %s6 = sld [smem:[#allocation0]]
  $region53: #{ce_with_pseudo.1} parent=0
    _
  %s8 = ssub.s32 1, %s6
  %s9 = scalar_select 0, %s8, %s6
  loop: start=0, step=1, limit=4
  $region2: #{ce_with_pseudo.1} parent=0 // loop_pre_header
    _
  $region3: #{ce_with_pseudo.1} parent=0 // loop_header
    %s11 = sphi 0, %s15
    %p12 = scmp.ge.s32.totalorder %s11, 4
    %s18 = sphi 0, %s30
    %s19 = sphi 0, %s26
    %s20 = sphi 0, %s18
    %s21 = sphi 0, %s19
    %s22 = sphi 0, %s20
    %s23 = sphi 0, %s21
    %s35 = sphi 0, %s37
    %s38 = sphi 0, %s35
    %s39 = sphi 0, %s38
    %s55 = sphi 0, %s39
    %s63 = sphi 0, %s65
    %s66 = sphi 0, %s63
    %s67 = sphi 0, %s66
    %s83 = sphi 0, %s67
    %s91 = sphi 0, %s93
    %s94 = sphi 0, %s91
    %s95 = sphi 0, %s94
    %s111 = sphi 0, %s95
    %s119 = sphi 0, %s121
    %s122 = sphi 0, %s119
    %s123 = sphi 0, %s122
    %s139 = sphi 0, %s123
    %s147 = sphi 0, %s149
    %s150 = sphi 0, %s147
    %s151 = sphi 0, %s150
    %s167 = sphi 0, %s151
  $region4: #{ce_with_pseudo.1} parent=0 // loop_header_branch
    %14 = sbr.rel (%p12) target = $region8
  $region5: #{ce_with_pseudo.1} parent=0 // loop_body
    %s16 = ssub.s32 %s11, 1
    %s17 = ssub.s32 %s11, 2
    %s24 = sadd.s32 1, %s19
    %p25 = scmp.ge.s32.totalorder %s24, 1
    %s26 = scalar_select %p25, 0, %s24
    %s27 = sadd.s32 1, %s18
    %s28 = scalar_select %p25, %s27, %s18
    %p29 = scmp.ge.s32.totalorder %s28, 2
    %s30 = scalar_select %p29, 0, %s28
    %s31 = ssub.s32 %s18, %s30
    %s32 = ssub.s32 %s19, %s26
    %s33 = sor.u32 %s31, %s32
    %p34 = scmp.eq.s32.totalorder %s33, 0
    %s36 = sadd.s32 %s35, 1
    %s37 = scalar_select %p34, %s35, %s36
    %p40 = pneg %p34
    %p41 = scmp.eq.s32.totalorder %s11, 1
    %p42 = por %p40, %p41
    %p43 = scmp.ne.s32.totalorder %s35, %s38
    %p44 = scmp.eq.s32.totalorder %s11, 0
    %p45 = por %p43, %p44
    %p46 = scmp.ne.s32.totalorder %s35, %s38
    %p47 = scmp.eq.s32.totalorder %s16, 1
    %p48 = por %p46, %p47
    %p49 = scmp.ne.s32.totalorder %s38, %s39
    %p50 = scmp.eq.s32.totalorder %s16, 0
    %p51 = por %p49, %p50
    %p52 = scmp.ne.s32.totalorder %s38, %s39
    %p53 = scmp.eq.s32.totalorder %s17, 1
    %p54 = por %p52, %p53
    %p56 = scmp.ne.s32.totalorder %s39, %s55
    %p57 = scmp.eq.s32.totalorder %s17, 0
    %p58 = por %p56, %p57
    %s59 = ssub.s32 %s18, %s30
    %s60 = ssub.s32 %s19, %s26
    %s61 = sor.u32 %s59, %s60
    %p62 = scmp.eq.s32.totalorder %s61, 0
    %s64 = sadd.s32 %s63, 1
    %s65 = scalar_select %p62, %s63, %s64
    %p68 = pneg %p62
    %p69 = scmp.eq.s32.totalorder %s11, 1
    %p70 = por %p68, %p69
    %p71 = scmp.ne.s32.totalorder %s63, %s66
    %p72 = scmp.eq.s32.totalorder %s11, 0
    %p73 = por %p71, %p72
    %p74 = scmp.ne.s32.totalorder %s63, %s66
    %p75 = scmp.eq.s32.totalorder %s16, 1
    %p76 = por %p74, %p75
    %p77 = scmp.ne.s32.totalorder %s66, %s67
    %p78 = scmp.eq.s32.totalorder %s16, 0
    %p79 = por %p77, %p78
    %p80 = scmp.ne.s32.totalorder %s66, %s67
    %p81 = scmp.eq.s32.totalorder %s17, 1
    %p82 = por %p80, %p81
    %p84 = scmp.ne.s32.totalorder %s67, %s83
    %p85 = scmp.eq.s32.totalorder %s17, 0
    %p86 = por %p84, %p85
    %s87 = ssub.s32 %s18, %s30
    %s88 = ssub.s32 %s19, %s26
    %s89 = sor.u32 %s87, %s88
    %p90 = scmp.eq.s32.totalorder %s89, 0
    %s92 = sadd.s32 %s91, 1
    %s93 = scalar_select %p90, %s91, %s92
    %p96 = pneg %p90
    %p97 = scmp.eq.s32.totalorder %s11, 1
    %p98 = por %p96, %p97
    %p99 = scmp.ne.s32.totalorder %s91, %s94
    %p100 = scmp.eq.s32.totalorder %s11, 0
    %p101 = por %p99, %p100
    %p102 = scmp.ne.s32.totalorder %s91, %s94
    %p103 = scmp.eq.s32.totalorder %s16, 1
    %p104 = por %p102, %p103
    %p105 = scmp.ne.s32.totalorder %s94, %s95
    %p106 = scmp.eq.s32.totalorder %s16, 0
    %p107 = por %p105, %p106
    %p108 = scmp.ne.s32.totalorder %s94, %s95
    %p109 = scmp.eq.s32.totalorder %s17, 1
    %p110 = por %p108, %p109
    %p112 = scmp.ne.s32.totalorder %s95, %s111
    %p113 = scmp.eq.s32.totalorder %s17, 0
    %p114 = por %p112, %p113
    %s115 = ssub.s32 %s18, %s30
    %s116 = ssub.s32 %s19, %s26
    %s117 = sor.u32 %s115, %s116
    %p118 = scmp.eq.s32.totalorder %s117, 0
    %s120 = sadd.s32 %s119, 1
    %s121 = scalar_select %p118, %s119, %s120
    %p124 = pneg %p118
    %p125 = scmp.eq.s32.totalorder %s11, 1
    %p126 = por %p124, %p125
    %p127 = scmp.ne.s32.totalorder %s119, %s122
    %p128 = scmp.eq.s32.totalorder %s11, 0
    %p129 = por %p127, %p128
    %p130 = scmp.ne.s32.totalorder %s119, %s122
    %p131 = scmp.eq.s32.totalorder %s16, 1
    %p132 = por %p130, %p131
    %p133 = scmp.ne.s32.totalorder %s122, %s123
    %p134 = scmp.eq.s32.totalorder %s16, 0
    %p135 = por %p133, %p134
    %p136 = scmp.ne.s32.totalorder %s122, %s123
    %p137 = scmp.eq.s32.totalorder %s17, 1
    %p138 = por %p136, %p137
    %p140 = scmp.ne.s32.totalorder %s123, %s139
    %p141 = scmp.eq.s32.totalorder %s17, 0
    %p142 = por %p140, %p141
    %s143 = ssub.s32 %s18, %s30
    %s144 = ssub.s32 %s19, %s26
    %s145 = sor.u32 %s143, %s144
    %p146 = scmp.eq.s32.totalorder %s145, 0
    %s148 = sadd.s32 %s147, 1
    %s149 = scalar_select %p146, %s147, %s148
    %p152 = pneg %p146
    %p153 = scmp.eq.s32.totalorder %s11, 1
    %p154 = por %p152, %p153
    %p155 = scmp.ne.s32.totalorder %s147, %s150
    %p156 = scmp.eq.s32.totalorder %s11, 0
    %p157 = por %p155, %p156
    %p158 = scmp.ne.s32.totalorder %s147, %s150
    %p159 = scmp.eq.s32.totalorder %s16, 1
    %p160 = por %p158, %p159
    %p161 = scmp.ne.s32.totalorder %s150, %s151
    %p162 = scmp.eq.s32.totalorder %s16, 0
    %p163 = por %p161, %p162
    %p164 = scmp.ne.s32.totalorder %s150, %s151
    %p165 = scmp.eq.s32.totalorder %s17, 1
    %p166 = por %p164, %p165
    %p168 = scmp.ne.s32.totalorder %s151, %s167
    %p169 = scmp.eq.s32.totalorder %s17, 0
    %p170 = por %p168, %p169
    %p171 = scmp.le.s32.totalorder 1, %s11
    %p172 = scmp.lt.s32.totalorder %s11, 3
    %p173 = pnand %p171, %p172
    %p174 = pneg %p173
    // Predicated region
    $region9: #{ce_with_pseudo.1} parent=5 // pred_check
      _
    $region10: #{ce_with_pseudo.1} parent=5 // pred_check_branch
      %176 = sbr.rel (%p173) target = $region12
    $region11: #{ce_with_pseudo.1} parent=5 // pred_region
      %s177 = ssub.s32 %s11, 1
    $region12: #{ce_with_pseudo.1} parent=5 // pred_fallthru
      _
    %p178 = scmp.lt.s32.totalorder %s11, 2
    // Predicated region
    $region13: #{ce_with_pseudo.1} parent=5 // pred_check
      %p179 = pneg %p178
    $region14: #{ce_with_pseudo.1} parent=5 // pred_check_branch
      %181 = sbr.rel (%p179) target = $region16
    $region15: #{ce_with_pseudo.1} parent=5 // pred_region
      // Predicated region
      $region17: #{ce_with_pseudo.1} parent=15 // pred_check
        %p182 = pneg %p45
      $region18: #{ce_with_pseudo.1} parent=15 // pred_check_branch
        %184 = sbr.rel (%p182) target = $region20
      $region19: #{ce_with_pseudo.1} parent=15 // pred_region
        %p185 = scmp.lt.s32.totalorder %s18, 1
        %s186 = scalar_select %p185, %s18, 1
        %p187 = scmp.lt.s32.totalorder %s19, 0
        %s188 = scalar_select %p187, %s19, 0
        %s189 = smul.addr %s186, 4
        %s190 = sadd.s32 %s188, %s189
        %s191 = smul.addr %s190, 2
        %s192 = scalar_lea.vmem %s0, %s191
      $region20: #{ce_with_pseudo.1} parent=15 // pred_fallthru
        _
      // Predicated region
      $region21: #{ce_with_pseudo.1} parent=15 // pred_check
        %p193 = pneg %p73
      $region22: #{ce_with_pseudo.1} parent=15 // pred_check_branch
        %195 = sbr.rel (%p193) target = $region24
      $region23: #{ce_with_pseudo.1} parent=15 // pred_region
        %p196 = scmp.lt.s32.totalorder %s18, 1
        %s197 = scalar_select %p196, %s18, 1
        %p198 = scmp.lt.s32.totalorder %s19, 0
        %s199 = scalar_select %p198, %s19, 0
        %s200 = smul.addr %s197, 4
        %s201 = sadd.s32 %s199, %s200
        %s202 = smul.addr %s201, 2
        %s203 = scalar_lea.vmem %s1, %s202
      $region24: #{ce_with_pseudo.1} parent=15 // pred_fallthru
        _
      // Predicated region
      $region25: #{ce_with_pseudo.1} parent=15 // pred_check
        %p204 = pneg %p101
      $region26: #{ce_with_pseudo.1} parent=15 // pred_check_branch
        %206 = sbr.rel (%p204) target = $region28
      $region27: #{ce_with_pseudo.1} parent=15 // pred_region
        %p207 = scmp.lt.s32.totalorder %s18, 1
        %s208 = scalar_select %p207, %s18, 1
        %p209 = scmp.lt.s32.totalorder %s19, 0
        %s210 = scalar_select %p209, %s19, 0
        %s211 = sadd.s32 %s210, %s208
        %s212 = smul.addr %s211, 2
        %s213 = scalar_lea.vmem %s2, %s212
      $region28: #{ce_with_pseudo.1} parent=15 // pred_fallthru
        _
    $region16: #{ce_with_pseudo.1} parent=5 // pred_fallthru
      _
    %p214 = scmp.le.s32.totalorder 1, %s11
    %p215 = scmp.lt.s32.totalorder %s11, 3
    %p216 = pnand %p214, %p215
    %p217 = pneg %p216
    // Predicated region
    $region29: #{ce_with_pseudo.1} parent=5 // pred_check
      _
    $region30: #{ce_with_pseudo.1} parent=5 // pred_check_branch
      %219 = sbr.rel (%p216) target = $region32
    $region31: #{ce_with_pseudo.1} parent=5 // pred_region
      %s220 = ssub.s32 %s11, 1
      %p221 = scmp.lt.s32.totalorder %s20, 1
      %s222 = scalar_select %p221, %s20, 1
      %p223 = scmp.lt.s32.totalorder %s21, 0
      %s224 = scalar_select %p223, %s21, 0
      %s225 = smul.addr %s222, 4
      %s226 = sadd.s32 %s224, %s225
      %s227 = smul.addr %s226, 2
      %s228 = scalar_lea.vmem %s0, %s227
      %p229 = pneg %p51
      %p230 = pneg %p48
      %p231 = scmp.lt.s32.totalorder %s20, 1
      %s232 = scalar_select %p231, %s20, 1
      %p233 = scmp.lt.s32.totalorder %s21, 0
      %s234 = scalar_select %p233, %s21, 0
      %s235 = smul.addr %s232, 4
      %s236 = sadd.s32 %s234, %s235
      %s237 = smul.addr %s236, 2
      %s238 = scalar_lea.vmem %s1, %s237
      %p239 = pneg %p79
      %p240 = pneg %p76
      %p241 = scmp.lt.s32.totalorder %s20, 1
      %s242 = scalar_select %p241, %s20, 1
      %p243 = scmp.lt.s32.totalorder %s21, 0
      %s244 = scalar_select %p243, %s21, 0
      %s245 = sadd.s32 %s244, %s242
      %s246 = smul.addr %s245, 2
      %s247 = scalar_lea.vmem %s2, %s246
      %p248 = pneg %p107
      %p249 = pneg %p104
      %p250 = pneg %p135
      %p251 = pneg %p132
      %p252 = scmp.lt.s32.totalorder %s20, 1
      %s253 = scalar_select %p252, %s20, 1
      %p254 = scmp.lt.s32.totalorder %s21, 0
      %s255 = scalar_select %p254, %s21, 0
      %s256 = sadd.s32 %s255, %s253
      %s257 = scalar_lea.vmem %s3, %s256
      %p258 = pneg %p163
      %p259 = pneg %p160
      %p260 = scmp.lt.s32.totalorder %s20, 1
      %s261 = scalar_select %p260, %s20, 1
      %p262 = scmp.lt.s32.totalorder %s21, 0
      %s263 = scalar_select %p262, %s21, 0
      %s264 = sadd.s32 %s263, %s261
      %s265 = scalar_lea.vmem %s4, %s264
      %p266 = scmp.lt.s32.totalorder %s20, 1
      %s267 = scalar_select %p266, %s20, 1
      %p268 = scmp.lt.s32.totalorder %s21, 0
      %s269 = scalar_select %p268, %s21, 0
      %s270 = smul.addr %s267, 4
      %s271 = sadd.s32 %s269, %s270
      %s272 = smul.addr %s271, 2
      %s273 = scalar_lea.vmem %s0, %s272
      %p274 = scmp.lt.s32.totalorder %s20, 1
      %s275 = scalar_select %p274, %s20, 1
      %p276 = scmp.lt.s32.totalorder %s21, 0
      %s277 = scalar_select %p276, %s21, 0
      %s278 = smul.addr %s275, 4
      %s279 = sadd.s32 %s277, %s278
      %s280 = smul.addr %s279, 2
      %s281 = scalar_lea.vmem %s1, %s280
      %p282 = scmp.lt.s32.totalorder %s20, 1
      %s283 = scalar_select %p282, %s20, 1
      %p284 = scmp.lt.s32.totalorder %s21, 0
      %s285 = scalar_select %p284, %s21, 0
      %s286 = sadd.s32 %s285, %s283
      %s287 = smul.addr %s286, 2
      %s288 = scalar_lea.vmem %s2, %s287
      %p289 = scmp.lt.s32.totalorder %s20, 1
      %s290 = scalar_select %p289, %s20, 1
      %p291 = scmp.lt.s32.totalorder %s21, 0
      %s292 = scalar_select %p291, %s21, 0
      %s293 = sadd.s32 %s292, %s290
      %s294 = scalar_lea.vmem %s3, %s293
      %p295 = scmp.lt.s32.totalorder %s20, 1
      %s296 = scalar_select %p295, %s20, 1
      %p297 = scmp.lt.s32.totalorder %s21, 0
      %s298 = scalar_select %p297, %s21, 0
      %s299 = sadd.s32 %s298, %s296
      %s300 = scalar_lea.vmem %s4, %s299
      %v301 = vld [vmem:[%s273] sm:$0x3]
      %v302 = vld [vmem:[%s273 + $0x2] sm:$0x3]
      %v303 = vld [vmem:[%s273 + $0x4] sm:$0x3]
      %v304 = vld [vmem:[%s273 + $0x6] sm:$0x3]
      %v305 = vld [vmem:[%s281] sm:$0x3]
      %v306 = vld [vmem:[%s281 + $0x2] sm:$0x3]
      %v307 = vld [vmem:[%s281 + $0x4] sm:$0x3]
      %v308 = vld [vmem:[%s281 + $0x6] sm:$0x3]
      %v309 = vld [vmem:[%s288] sm:$0x3]
      %vm310 = vcmask 1041408
      %v311 = vsel %vm310, %v301, -inf
      %v312 = vsel %vm310, %v302, -inf
      %v313 = vsel %vm310, %v303, -inf
      %v314 = vsel %vm310, %v304, -inf
      %v315 = vmax.f32 %v311, %v312
      %v316 = vmax.f32 %v313, %v314
      %v317 = vmax.f32 %v315, %v316
      %v318 = vsel %vm310, %v305, -inf
      %v319 = vsel %vm310, %v306, -inf
      %v320 = vsel %vm310, %v307, -inf
      %v321 = vsel %vm310, %v308, -inf
      %v322 = vmax.f32 %v318, %v319
      %v323 = vmax.f32 %v320, %v321
      %v324 = vmax.f32 %v322, %v323
      %v325 = vsub.f32 %v301, %v317
      %v326 = vsub.f32 %v302, %v317
      %v327 = vsub.f32 %v303, %v317
      %v328 = vsub.f32 %v304, %v317
      %v329 = vmul.f32 %v325, 1.442695
      %v330 = vpow.pop %v329
      %v331 = vmul.f32 %v326, 1.442695
      %v332 = vpow.pop %v331
      %v333 = vmul.f32 %v327, 1.442695
      %v334 = vpow.pop %v333
      %v335 = vmul.f32 %v328, 1.442695
      %v336 = vpow.pop %v335
      %v337 = vsel %vm310, %v330, 0.0
      %v338 = vsel %vm310, %v332, 0.0
      %v339 = vadd.f32 %v337, %v338
      %v340 = vsel %vm310, %v334, 0.0
      %v341 = vadd.f32 %v339, %v340
      %v342 = vsel %vm310, %v336, 0.0
      %v343 = vadd.f32 %v341, %v342
      %v344 = vsub.f32 %v305, %v324
      %v345 = vsub.f32 %v306, %v324
      %v346 = vsub.f32 %v307, %v324
      %v347 = vsub.f32 %v308, %v324
      %v348 = vmul.f32 %v344, 1.442695
      %v349 = vpow.pop %v348
      %v350 = vmul.f32 %v345, 1.442695
      %v351 = vpow.pop %v350
      %v352 = vmul.f32 %v346, 1.442695
      %v353 = vpow.pop %v352
      %v354 = vmul.f32 %v347, 1.442695
      %v355 = vpow.pop %v354
      %v356 = vsel %vm310, %v349, 0.0
      %v357 = vsel %vm310, %v351, 0.0
      %v358 = vadd.f32 %v356, %v357
      %v359 = vsel %vm310, %v353, 0.0
      %v360 = vadd.f32 %v358, %v359
      %v361 = vsel %vm310, %v355, 0.0
      %v362 = vadd.f32 %v360, %v361
      %v363 = vsub.f32 %v305, %v301
      %v364 = vsub.f32 %v306, %v302
      %v365 = vsub.f32 %v307, %v303
      %v366 = vsub.f32 %v308, %v304
      %v367 = vmul.f32 %v349, %v363
      %v368 = vmul.f32 %v351, %v364
      %v369 = vmul.f32 %v353, %v365
      %v370 = vmul.f32 %v355, %v366
      %v371 = vsel %vm310, %v367, 0.0
      %v372 = vsel %vm310, %v368, 0.0
      %v373 = vadd.f32 %v371, %v372
      %v374 = vsel %vm310, %v369, 0.0
      %v375 = vadd.f32 %v373, %v374
      %v376 = vsel %vm310, %v370, 0.0
      %v377 = vadd.f32 %v375, %v376
      %v378 = vlog2.pop %v343
      %v379 = vmul.f32 %v378, 0.6931472
      %v380 = vlog2.pop %v362
      %v381 = vmul.f32 %v380, 0.6931472
      %v382 = vrcp.pop %v362
      %v383 = vmul.f32 %v377, %v382
      %v384 = vsub.f32 %v317, %v324
      %v385 = vadd.f32 %v383, %v384
      %v386 = vsub.f32 %v379, %v381
      %v387 = vadd.f32 %v385, %v386
      %vm388 = vcmp.eq.s32.totalorder %v309, 0
      %vm389 = vcmp.eq.s32.totalorder %v309, 1
      %vm390 = vcmp.eq.s32.totalorder %v309, 2
      %vm391 = vcmp.eq.s32.totalorder %v309, 3
      %v392 = vsel %vm388, %v301, 0.0
      %v393 = vsel %vm389, %v302, 0.0
      %v394 = vsel %vm390, %v303, 0.0
      %v395 = vsel %vm391, %v304, 0.0
      %v396 = vsel %vm310, %v392, 0.0
      %v397 = vsel %vm310, %v393, 0.0
      %v398 = vadd.f32 %v396, %v397
      %v399 = vsel %vm310, %v394, 0.0
      %v400 = vadd.f32 %v398, %v399
      %v401 = vsel %vm310, %v395, 0.0
      %v402 = vadd.f32 %v400, %v401
      %v403 = vadd.f32 %v317, %v379
      %v404 = vsub.f32 %v403, %v402
      %vm405 = vcmp.eq.s32.totalorder %v309, 4294967295
      %v406 = vsel %vm405, 0.0, %v404
      %v407 = vsub.f32 0.0, %v387
      %v408 = vmul.f32 %v407, 1.442695
      %v409 = vpow.pop %v408
      %v410 = vmul.f32 %v406, %v409
      %v411 = vsel %vm310, %v410, 0.0
      %v412 = vrot.slane %v411, 4
      %v413 = vadd.f32 %v411, %v412
      %v414 = vrot.slane %v413, 2
      %v415 = vadd.f32 %v413, %v414
      %v416 = vrot.slane %v415, 1
      %v417 = vadd.f32 %v415, %v416
      %418 = vst [vmem:[%s294] sm:$0x1] %v417
      %v419 = vsel %vm310, %v387, 0.0
      %v420 = vrot.slane %v419, 4
      %v421 = vadd.f32 %v419, %v420
      %v422 = vrot.slane %v421, 2
      %v423 = vadd.f32 %v421, %v422
      %v424 = vrot.slane %v423, 1
      %v425 = vadd.f32 %v423, %v424
      %426 = vst [vmem:[%s300] sm:$0x1] %v425
      %p427 = scmp.lt.s32.totalorder %s20, 1
      %s428 = scalar_select %p427, %s20, 1
      %p429 = scmp.lt.s32.totalorder %s21, 0
      %s430 = scalar_select %p429, %s21, 0
      %s431 = sadd.s32 %s430, %s428
      %s432 = scalar_lea.vmem %s3, %s431
      %p433 = scmp.lt.s32.totalorder %s20, 1
      %s434 = scalar_select %p433, %s20, 1
      %p435 = scmp.lt.s32.totalorder %s21, 0
      %s436 = scalar_select %p435, %s21, 0
      %s437 = sadd.s32 %s436, %s434
      %s438 = scalar_lea.vmem %s4, %s437
      // Predicated region
      $region33: #{ce_with_pseudo.1} parent=31 // pred_check
        %p439 = pneg %p132
      $region34: #{ce_with_pseudo.1} parent=31 // pred_check_branch
        %441 = sbr.rel (%p439) target = $region36
      $region35: #{ce_with_pseudo.1} parent=31 // pred_region
        _
      $region36: #{ce_with_pseudo.1} parent=31 // pred_fallthru
        _
      // Predicated region
      $region37: #{ce_with_pseudo.1} parent=31 // pred_check
        %p442 = pneg %p160
      $region38: #{ce_with_pseudo.1} parent=31 // pred_check_branch
        %444 = sbr.rel (%p442) target = $region40
      $region39: #{ce_with_pseudo.1} parent=31 // pred_region
        _
      $region40: #{ce_with_pseudo.1} parent=31 // pred_fallthru
        _
    $region32: #{ce_with_pseudo.1} parent=5 // pred_fallthru
      _
    %p445 = scmp.le.s32.totalorder 2, %s11
    // Predicated region
    $region41: #{ce_with_pseudo.1} parent=5 // pred_check
      %p446 = pneg %p445
    $region42: #{ce_with_pseudo.1} parent=5 // pred_check_branch
      %448 = sbr.rel (%p446) target = $region44
    $region43: #{ce_with_pseudo.1} parent=5 // pred_region
      %s449 = ssub.s32 %s11, 2
      // Predicated region
      $region45: #{ce_with_pseudo.1} parent=43 // pred_check
        %p450 = pneg %p138
      $region46: #{ce_with_pseudo.1} parent=43 // pred_check_branch
        %452 = sbr.rel (%p450) target = $region48
      $region47: #{ce_with_pseudo.1} parent=43 // pred_region
        %p453 = scmp.lt.s32.totalorder %s22, 1
        %s454 = scalar_select %p453, %s22, 1
        %p455 = scmp.lt.s32.totalorder %s23, 0
        %s456 = scalar_select %p455, %s23, 0
        %s457 = sadd.s32 %s456, %s454
        %s458 = scalar_lea.vmem %s3, %s457
      $region48: #{ce_with_pseudo.1} parent=43 // pred_fallthru
        _
      // Predicated region
      $region49: #{ce_with_pseudo.1} parent=43 // pred_check
        %p459 = pneg %p166
      $region50: #{ce_with_pseudo.1} parent=43 // pred_check_branch
        %461 = sbr.rel (%p459) target = $region52
      $region51: #{ce_with_pseudo.1} parent=43 // pred_region
        %p462 = scmp.lt.s32.totalorder %s22, 1
        %s463 = scalar_select %p462, %s22, 1
        %p464 = scmp.lt.s32.totalorder %s23, 0
        %s465 = scalar_select %p464, %s23, 0
        %s466 = sadd.s32 %s465, %s463
        %s467 = scalar_lea.vmem %s4, %s466
      $region52: #{ce_with_pseudo.1} parent=43 // pred_fallthru
        _
    $region44: #{ce_with_pseudo.1} parent=5 // pred_fallthru
      _
  $region6: #{ce_with_pseudo.1} parent=0 // loop_footer
    %s15 = sadd.s32 1, %s11
  $region7: #{ce_with_pseudo.1} parent=0 // loop_footer_branch
    %10 = sbr.rel target = $region3
  $region8: #{ce_with_pseudo.1} parent=0 // loop_exit
    _

</llo_original>
